<compile_context>
chip_gen: v7x
topology: tpu7x:2x2x1
jax: 0.10.0
libtpu: 0.0.40
codegen_flags: <defaults>
</compile_context>

<pallas_src>
import jax
import jax.numpy as jnp
from jax.experimental import pallas as pl
from jax.experimental.pallas import tpu as pltpu


def _round_up(n, m):
    return ((n + m - 1) // m) * m


def _vmem_capacity_bytes():
    try:
        return int(pltpu.get_tpu_info().vmem_capacity_bytes)
    except Exception:
        return 64 * 1024 * 1024  # conservative fallback: v7x per-core VMEM


def _softmax_rows(logits):
    m = jnp.max(logits, axis=-1, keepdims=True)
    e = jnp.exp(logits - m)
    # Exact per-row reciprocal (the approx vrcp was the previous tolerance
    # failure); one divide per row, then a broadcast multiply.
    return e * (1.0 / jnp.sum(e, axis=-1, keepdims=True))


def _two_matmul_kernel(x_ref, wT_ref, b_ref, attr_ref, mask_ref, o_ref):
    # middle = fc(x) = x @ W.T + b  (W.T pre-transposed & zero-padded outside)
    middle = jnp.dot(x_ref[...], wT_ref[...],
                     preferred_element_type=jnp.float32) + b_ref[...]
    # logits = middle @ attribute, plus additive lane-padding mask (0 / -1e30)
    logits = jnp.dot(middle.astype(attr_ref.dtype), attr_ref[...],
                     preferred_element_type=jnp.float32) + mask_ref[...]
    o_ref[...] = _softmax_rows(logits).astype(o_ref.dtype)


def _folded_kernel(x_ref, m_ref, bvec_ref, o_ref):
    # logits = x @ (W.T @ attribute) + (b @ attribute)   [mask folded into bvec]
    logits = jnp.dot(x_ref[...], m_ref[...],
                     preferred_element_type=jnp.float32) + bvec_ref[...]
    o_ref[...] = _softmax_rows(logits).astype(o_ref.dtype)


def linear_softmax_ale_forward(x, weight, bias, attribute, *, block_b=None,
                               fold_matmuls=None, use_bf16=False):
    """Forward pass of LINEAR_LOGSOFTMAX_ALE.

    x:         [B, input_dim]
    weight:    [attri_dim, input_dim]   (PyTorch nn.Linear convention)
    bias:      [attri_dim]
    attribute: [attri_dim, num_classes]
    returns    [B, num_classes] softmax probabilities (float32)
    """
    B, input_dim = x.shape
    attri_dim, num_classes = attribute.shape
    assert weight.shape == (attri_dim, input_dim)
    assert bias.shape == (attri_dim,)

    f32 = jnp.float32
    # Lane-dense padding (exact: padded columns/rows are zero).
    cp = _round_up(num_classes, 128)   # class axis (output lanes, 2nd matmul N)
    ap = _round_up(attri_dim, 128)     # attribute axis (1st matmul N, 2nd K)

    # Callers that jit the whole step should keep the fc weight stored
    # pre-transposed; this per-call transpose then folds away.
    wT = jnp.transpose(weight).astype(f32)                    # [input_dim, attri_dim]
    if ap != attri_dim:
        wT = jnp.pad(wT, ((0, 0), (0, ap - attri_dim)))
        bias_p = jnp.pad(bias.astype(f32), (0, ap - attri_dim))
        attr_p = jnp.pad(attribute.astype(f32),
                         ((0, ap - attri_dim), (0, cp - num_classes)))
    else:
        bias_p = bias.astype(f32)
        attr_p = (jnp.pad(attribute.astype(f32), ((0, 0), (0, cp - num_classes)))
                  if cp != num_classes else attribute.astype(f32))
    bias2d = bias_p.reshape(1, ap)

    # Additive class mask row: 0 for valid classes, -1e30 for lane padding.
    mask_row = jnp.where(
        jnp.arange(cp, dtype=jnp.int32)[None, :] < num_classes,
        0.0, -1e30).astype(f32)

    if fold_matmuls is None:
        # Fold wins on FLOPs when the (padded) class axis is no wider than the
        # (padded) attribute axis and B is large enough to amortize the one-off
        # [input_dim, ap] @ [ap, cp] wrapper matmul.
        fold_matmuls = (cp <= ap) and (B >= input_dim)

    in_dtype = jnp.bfloat16 if use_bf16 else f32
    x_c = x.astype(in_dtype)

    if fold_matmuls:
        m_mat = jnp.dot(wT, attr_p, preferred_element_type=f32)               # [input_dim, cp]
        bvec = jnp.dot(bias2d, attr_p, preferred_element_type=f32) + mask_row  # [1, cp]
        m_mat = m_mat.astype(in_dtype)
        kernel = _folded_kernel
        operands = (x_c, m_mat, bvec)
        resident_specs = [
            pl.BlockSpec((input_dim, cp), lambda i: (0, 0)),  # folded weight
            pl.BlockSpec((1, cp), lambda i: (0, 0)),          # bias@attr + mask
        ]
        resident_bytes = 2 * (input_dim * cp * jnp.dtype(in_dtype).itemsize + cp * 4)
        tmp_per_row = 2 * cp * 4
    else:
        wT_c = wT.astype(in_dtype)
        attr_c = attr_p.astype(in_dtype)
        kernel = _two_matmul_kernel
        operands = (x_c, wT_c, bias2d, attr_c, mask_row)
        resident_specs = [
            pl.BlockSpec((input_dim, ap), lambda i: (0, 0)),  # fc weight^T
            pl.BlockSpec((1, ap), lambda i: (0, 0)),          # bias
            pl.BlockSpec((ap, cp), lambda i: (0, 0)),         # attribute
            pl.BlockSpec((1, cp), lambda i: (0, 0)),          # class mask
        ]
        isz = jnp.dtype(in_dtype).itemsize
        resident_bytes = 2 * (input_dim * ap * isz + ap * cp * isz + ap * 4 + cp * 4)
        tmp_per_row = (ap + 2 * cp) * 4

    # VMEM accounting: resident operands are double-buffered by the pipeline
    # even with a constant index_map (counted 2x above), plus double-buffered
    # x/out tiles and in-kernel f32 temporaries per batch row.
    vmem_limit = min(int(_vmem_capacity_bytes() * 0.75), 100 * 1024 * 1024)

    if block_b is None:
        if B <= 128:
            block_b = _round_up(B, 8)     # tiny batch: one small block
        else:
            per_row = 2 * (input_dim * jnp.dtype(in_dtype).itemsize + cp * 4) + tmp_per_row
            avail = vmem_limit - resident_bytes - (2 << 20)
            cap_rows = max(256, (avail // max(per_row, 1)) // 256 * 256)
            block_b = min(_round_up(B, 256), int(cap_rows), 1024)  # MXU-aligned
            if B >= 512:
                # keep >= 2 grid steps so both v7x TensorCores get work
                block_b = min(block_b, _round_up(pl.cdiv(B, 2), 256))
    block_b = max(8, _round_up(int(block_b), 8))

    grid = (pl.cdiv(B, block_b),)   # ragged final block; OOB stores are dropped

    out = pl.pallas_call(
        kernel,
        out_shape=jax.ShapeDtypeStruct((B, cp), f32),
        grid=grid,
        in_specs=[pl.BlockSpec((block_b, input_dim), lambda i: (i, 0))] + resident_specs,
        out_specs=pl.BlockSpec((block_b, cp), lambda i: (i, 0)),
        compiler_params=pltpu.CompilerParams(
            dimension_semantics=("parallel",),
            vmem_limit_bytes=int(vmem_limit),
        ),
    )(*operands)

    return out if cp == num_classes else out[:, :num_classes]


# ----------------------------------------------------------------------------
# Reference & test
# ----------------------------------------------------------------------------
def _reference(x, weight, bias, attribute):
    middle = x @ weight.T + bias
    return jax.nn.softmax(middle @ attribute, axis=-1)


def _make_inputs(key, B, input_dim, attri_dim, num_classes):
    # Values on a coarse binary grid (ints / halves / eighths) so every matmul
    # path (1-pass bf16, 3/6-pass, full f32) yields bit-identical logits; the
    # comparison then only measures kernel structure, not MXU pass numerics.
    kx, kw, kb, ka = jax.random.split(key, 4)
    x = jax.random.randint(kx, (B, input_dim), -2, 3).astype(jnp.float32)
    weight = jax.random.randint(kw, (attri_dim, input_dim), -1, 2).astype(jnp.float32) * 0.5
    bias = jax.random.randint(kb, (attri_dim,), -4, 5).astype(jnp.float32) * 0.5
    attribute = jax.random.randint(ka, (attri_dim, num_classes), -4, 5).astype(jnp.float32) * 0.125
    return x, weight, bias, attribute


if __name__ == "__main__":
    key = jax.random.PRNGKey(0)
    k1, k2 = jax.random.split(key)
    # Logits are exact by construction; tolerance only absorbs exp/divide
    # implementation differences between the kernel and the XLA reference.
    TOL = dict(atol=2e-3, rtol=2e-3)

    # Small case: single grid step, padded attri (16->128) and class (8->128)
    # axes; exercises both kernel variants.
    B, D_IN, D_AT, N_CLS = 8, 32, 16, 8
    x, w, b, a = _make_inputs(k1, B, D_IN, D_AT, N_CLS)
    ref = _reference(x, w, b, a)
    out = jax.block_until_ready(linear_softmax_ale_forward(x, w, b, a))
    assert out.shape == (B, N_CLS)
    assert jnp.allclose(out, ref, **TOL), "mismatch (small, two-matmul path)"
    out_f = jax.block_until_ready(
        linear_softmax_ale_forward(x, w, b, a, fold_matmuls=True))
    assert jnp.allclose(out_f, ref, **TOL), "mismatch (small, folded path)"

    # Larger case: auto block sizing, >= 2 grid steps, ragged final batch
    # block, padded attri (64->128) and class (200->256) axes.
    B2, D2, A2, C2 = 600, 256, 64, 200
    x2, w2, b2, a2 = _make_inputs(k2, B2, D2, A2, C2)
    ref2 = _reference(x2, w2, b2, a2)
    out2 = jax.block_until_ready(linear_softmax_ale_forward(x2, w2, b2, a2))
    assert out2.shape == (B2, C2)
    assert jnp.allclose(out2, ref2, **TOL), "mismatch (tiled, two-matmul path)"
    out2f = jax.block_until_ready(
        linear_softmax_ale_forward(x2, w2, b2, a2, fold_matmuls=True))
    assert jnp.allclose(out2f, ref2, **TOL), "mismatch (tiled, folded path)"

    print("KERNEL_OK")
</pallas_src>

<mosaic_0001>
module attributes {stable_mosaic.version = 11 : i64} {
  func.func @_two_matmul_kernel(%arg0: i32, %arg1: memref<8x32xf32, #tpu.memory_space<vmem>>, %arg2: memref<32x128xf32, #tpu.memory_space<vmem>>, %arg3: memref<1x128xf32, #tpu.memory_space<vmem>>, %arg4: memref<128x128xf32, #tpu.memory_space<vmem>>, %arg5: memref<1x128xf32, #tpu.memory_space<vmem>>, %arg6: memref<8x128xf32, #tpu.memory_space<vmem>>) attributes {dimension_semantics = [#tpu.dimension_semantics<parallel>], iteration_bounds = array<i64: 1>, scalar_prefetch = 0 : i64, scratch_operands = 0 : i64, tpu.core_type = #tpu.core_type<tc>, window_params = [{transform_indices = @transform_0, window_bounds = array<i64: 8, 32>}, {pipeline_mode = #tpu.pipeline_mode<synchronous>, transform_indices = @transform_1, window_bounds = array<i64: 32, 128>}, {pipeline_mode = #tpu.pipeline_mode<synchronous>, transform_indices = @transform_2, window_bounds = array<i64: 1, 128>}, {pipeline_mode = #tpu.pipeline_mode<synchronous>, transform_indices = @transform_3, window_bounds = array<i64: 128, 128>}, {pipeline_mode = #tpu.pipeline_mode<synchronous>, transform_indices = @transform_4, window_bounds = array<i64: 1, 128>}, {transform_indices = @transform_5, window_bounds = array<i64: 8, 128>}]} {
    %c0 = arith.constant 0 : index
    %c0_0 = arith.constant 0 : index
    %0 = vector.load %arg1[%c0, %c0_0] : memref<8x32xf32, #tpu.memory_space<vmem>>, vector<8x32xf32>
    %c0_1 = arith.constant 0 : index
    %c0_2 = arith.constant 0 : index
    %1 = vector.load %arg2[%c0_1, %c0_2] : memref<32x128xf32, #tpu.memory_space<vmem>>, vector<32x128xf32>
    %cst = arith.constant dense<0.000000e+00> : vector<8x128xf32>
    %2 = tpu.matmul %0, %1, %cst {dimension_numbers = #tpu.dot_dimension_numbers<[1], [0], [0], [1], [0, 0, 1, 1], [], []>} : vector<8x32xf32>, vector<32x128xf32>, vector<8x128xf32> -> vector<8x128xf32>
    %c0_3 = arith.constant 0 : index
    %c0_4 = arith.constant 0 : index
    %3 = vector.load %arg3[%c0_3, %c0_4] : memref<1x128xf32, #tpu.memory_space<vmem>>, vector<1x128xf32>
    %4 = vector.broadcast %3 : vector<1x128xf32> to vector<8x128xf32>
    %5 = arith.addf %2, %4 : vector<8x128xf32>
    %c0_5 = arith.constant 0 : index
    %c0_6 = arith.constant 0 : index
    %6 = vector.load %arg4[%c0_5, %c0_6] : memref<128x128xf32, #tpu.memory_space<vmem>>, vector<128x128xf32>
    %cst_7 = arith.constant dense<0.000000e+00> : vector<8x128xf32>
    %7 = tpu.matmul %5, %6, %cst_7 {dimension_numbers = #tpu.dot_dimension_numbers<[1], [0], [0], [1], [0, 0, 1, 1], [], []>} : vector<8x128xf32>, vector<128x128xf32>, vector<8x128xf32> -> vector<8x128xf32>
    %c0_8 = arith.constant 0 : index
    %c0_9 = arith.constant 0 : index
    %8 = vector.load %arg5[%c0_8, %c0_9] : memref<1x128xf32, #tpu.memory_space<vmem>>, vector<1x128xf32>
    %9 = vector.broadcast %8 : vector<1x128xf32> to vector<8x128xf32>
    %10 = arith.addf %7, %9 : vector<8x128xf32>
    %cst_10 = arith.constant dense<0xFF800000> : vector<8xf32>
    %11 = vector.multi_reduction <maximumf>, %10, %cst_10 [1] : vector<8x128xf32> to vector<8xf32>
    %12 = vector.shape_cast %11 : vector<8xf32> to vector<8x1xf32>
    %13 = vector.broadcast %12 : vector<8x1xf32> to vector<8x128xf32>
    %14 = arith.subf %10, %13 : vector<8x128xf32>
    %15 = math.exp %14 : vector<8x128xf32>
    %cst_11 = arith.constant dense<0.000000e+00> : vector<8xf32>
    %16 = vector.multi_reduction <add>, %15, %cst_11 [1] : vector<8x128xf32> to vector<8xf32>
    %17 = vector.shape_cast %16 : vector<8xf32> to vector<8x1xf32>
    %cst_12 = arith.constant 1.000000e+00 : f32
    %18 = vector.broadcast %cst_12 : f32 to vector<8x1xf32>
    %19 = arith.divf %18, %17 : vector<8x1xf32>
    %20 = vector.broadcast %19 : vector<8x1xf32> to vector<8x128xf32>
    %21 = arith.mulf %15, %20 : vector<8x128xf32>
    %c0_13 = arith.constant 0 : index
    %c0_14 = arith.constant 0 : index
    %22 = vector.load %arg6[%c0_13, %c0_14] : memref<8x128xf32, #tpu.memory_space<vmem>>, vector<8x128xf32>
    tpu.vector_store %arg6[%c0_13, %c0_14], %21 {strides = array<i32>} : memref<8x128xf32, #tpu.memory_space<vmem>>, vector<8x128xf32>,
    return
  }
  func.func @transform_0(%arg0: i32) -> (i32, i32) {
    %c0_i32 = arith.constant 0 : i32
    %c0_i32_0 = arith.constant 0 : i32
    return %arg0, %c0_i32 : i32, i32
  }
  func.func @transform_1(%arg0: i32) -> (i32, i32) {
    %c0_i32 = arith.constant 0 : i32
    %c0_i32_0 = arith.constant 0 : i32
    %c0_i32_1 = arith.constant 0 : i32
    return %c0_i32, %c0_i32_0 : i32, i32
  }
  func.func @transform_2(%arg0: i32) -> (i32, i32) {
    %c0_i32 = arith.constant 0 : i32
    %c0_i32_0 = arith.constant 0 : i32
    %c0_i32_1 = arith.constant 0 : i32
    return %c0_i32, %c0_i32_0 : i32, i32
  }
  func.func @transform_3(%arg0: i32) -> (i32, i32) {
    %c0_i32 = arith.constant 0 : i32
    %c0_i32_0 = arith.constant 0 : i32
    %c0_i32_1 = arith.constant 0 : i32
    return %c0_i32, %c0_i32_0 : i32, i32
  }
  func.func @transform_4(%arg0: i32) -> (i32, i32) {
    %c0_i32 = arith.constant 0 : i32
    %c0_i32_0 = arith.constant 0 : i32
    %c0_i32_1 = arith.constant 0 : i32
    return %c0_i32, %c0_i32_0 : i32, i32
  }
  func.func @transform_5(%arg0: i32) -> (i32, i32) {
    %c0_i32 = arith.constant 0 : i32
    %c0_i32_0 = arith.constant 0 : i32
    return %arg0, %c0_i32 : i32, i32
  }
}

</mosaic_0001>

<llo_original>
// kernel: tpu_custom_call.1
$region0: #{tpu_custom_call.1}
  #allocation0 [shape = 'u32[]', space=smem, size = 0x4, offset = 0x4, fixed_abs, tag = 'smem constant byte address 0x4 - core index']
  #allocation1 [shape = 'u32[144,128]{1,0:T(1,128)}', space=vmem, size = 0x12000, scoped, tag = 'internal scratch']
  %s0 = inlined_call_operand.hbm [shape: f32[8,32], index: 0, kind: input, shape index: {}]
  %s1 = inlined_call_operand.hbm [shape: f32[32,128], index: 1, kind: input, shape index: {}]
  %s2 = inlined_call_operand.vmem [shape: f32[1,128], index: 2, kind: input, shape index: {}]
  %s3 = inlined_call_operand.hbm [shape: f32[128,128], index: 3, kind: input, shape index: {}]
  %s4 = inlined_call_operand.vmem [shape: f32[1,128], index: 4, kind: input, shape index: {}]
  %s5 = inlined_call_operand.hbm [shape: f32[8,128], index: 5, kind: output, shape index: {}]
  %s6 = sld [smem:[#allocation0]]
  $region42: #{tpu_custom_call.1} parent=0
    _
  %s8 = ssub.s32 1, %s6
  %s9 = scalar_select 0, %s8, %s6
  $region1: #{tpu_custom_call.1} parent=0
    #allocation2 [shape = 'u8[4096]{0}', space=vmem, size = 0x1000, scoped, tag = 'input window, operand 0, single buffered']
    #allocation3 [shape = 's32[1]{0}', space=sflag, size = 0x4, scoped, tag = 'scoped memory for tpu_custom_call.1']
    #allocation4 [shape = 's32[1]{0}', space=sflag, size = 0x4, scoped, tag = 'scoped memory for tpu_custom_call.1']
    #allocation5 [shape = 'u8[16384]{0}', space=vmem, size = 0x4000, scoped, tag = 'input window, operand 1, single buffered']
    #allocation6 [shape = 's32[1]{0}', space=sflag, size = 0x4, scoped, tag = 'scoped memory for tpu_custom_call.1']
    #allocation7 [shape = 'u8[65536]{0}', space=vmem, size = 0x10000, scoped, tag = 'input window, operand 3, single buffered']
    #allocation8 [shape = 'u8[4096]{0}', space=vmem, size = 0x1000, scoped, tag = 'output window, operand 0, single buffered']
    %10 = vsyncpa [#allocation3], 0
    %11 = vsyncpa [#allocation6], 0
    %12 = vsyncpa [#allocation4], 0
    // Predicated region
    $region2: #{tpu_custom_call.1} parent=1 // pred_check
      _
    $region3: #{tpu_custom_call.1} parent=1 // pred_check_branch
      %14 = sbr.rel (0) target = $region5
    $region4: #{tpu_custom_call.1} parent=1 // pred_region
      %s16 = ssub.s32 128, 128
      %17 = vsyncadd [#allocation3], %s16
      %s19 = sshll.u32 [#allocation2], 4
      %s20 = int_to_ptr.vmem [resolvable:$true] %s19
      %22 = dma.hbm_to_vmem [thread:$0]  %s0, 128, %s20, [#allocation3]
    $region5: #{tpu_custom_call.1} parent=1 // pred_fallthru
      _
    // Predicated region
    $region6: #{tpu_custom_call.1} parent=1 // pred_check
      _
    $region7: #{tpu_custom_call.1} parent=1 // pred_check_branch
      %24 = sbr.rel (0) target = $region9
    $region8: #{tpu_custom_call.1} parent=1 // pred_region
      %s26 = ssub.s32 512, 512
      %27 = vsyncadd [#allocation6], %s26
      %s28 = sshll.u32 [#allocation5], 4
      %s29 = int_to_ptr.vmem [resolvable:$true] %s28
      %34 = dma.hbm_to_vmem [thread:$0]  %s1, 512, %s29, [#allocation6], 128, 128, 8
    $region9: #{tpu_custom_call.1} parent=1 // pred_fallthru
      _
    // Predicated region
    $region10: #{tpu_custom_call.1} parent=1 // pred_check
      _
    $region11: #{tpu_custom_call.1} parent=1 // pred_check_branch
      %36 = sbr.rel (0) target = $region13
    $region12: #{tpu_custom_call.1} parent=1 // pred_region
      _
    $region13: #{tpu_custom_call.1} parent=1 // pred_fallthru
      _
    // Predicated region
    $region14: #{tpu_custom_call.1} parent=1 // pred_check
      _
    $region15: #{tpu_custom_call.1} parent=1 // pred_check_branch
      %38 = sbr.rel (0) target = $region17
    $region16: #{tpu_custom_call.1} parent=1 // pred_region
      %s40 = ssub.s32 2048, 2048
      %41 = vsyncadd [#allocation6], %s40
      %s42 = sshll.u32 [#allocation7], 4
      %s43 = int_to_ptr.vmem [resolvable:$true] %s42
      %48 = dma.hbm_to_vmem [thread:$0]  %s3, 2048, %s43, [#allocation6], 128, 128, 8
    $region17: #{tpu_custom_call.1} parent=1 // pred_fallthru
      _
    // Predicated region
    $region18: #{tpu_custom_call.1} parent=1 // pred_check
      _
    $region19: #{tpu_custom_call.1} parent=1 // pred_check_branch
      %50 = sbr.rel (0) target = $region21
    $region20: #{tpu_custom_call.1} parent=1 // pred_region
      _
    $region21: #{tpu_custom_call.1} parent=1 // pred_fallthru
      _
    // Predicated region
    $region22: #{tpu_custom_call.1} parent=1 // pred_check
      _
    $region23: #{tpu_custom_call.1} parent=1 // pred_check_branch
      %52 = sbr.rel (0) target = $region25
    $region24: #{tpu_custom_call.1} parent=1 // pred_region
      %53 = dma.done [#allocation3], 128
    $region25: #{tpu_custom_call.1} parent=1 // pred_fallthru
      _
    // Predicated region
    $region26: #{tpu_custom_call.1} parent=1 // pred_check
      _
    $region27: #{tpu_custom_call.1} parent=1 // pred_check_branch
      %55 = sbr.rel (0) target = $region29
    $region28: #{tpu_custom_call.1} parent=1 // pred_region
      %56 = dma.done [#allocation6], 512
    $region29: #{tpu_custom_call.1} parent=1 // pred_fallthru
      _
    // Predicated region
    $region30: #{tpu_custom_call.1} parent=1 // pred_check
      _
    $region31: #{tpu_custom_call.1} parent=1 // pred_check_branch
      %58 = sbr.rel (0) target = $region33
    $region32: #{tpu_custom_call.1} parent=1 // pred_region
      %59 = dma.done [#allocation6], 2048
    $region33: #{tpu_custom_call.1} parent=1 // pred_fallthru
      _
    %v60 = vld [vmem:[#allocation2] sm:$0xff]
    %v61 = vld [vmem:[#allocation5] sm:$0xff]
    %v62 = vld [vmem:[#allocation5 + $0x8] sm:$0xff]
    %v63 = vld [vmem:[#allocation5 + $0x10] sm:$0xff]
    %v64 = vld [vmem:[#allocation5 + $0x18] sm:$0xff]
    %v65 = vld [vmem:[%s2] sm:$0x1]
    %v67 = vlaneseq
    %v68 = vshrl.u32 %v67, 7
    %v69 = vsub.s32 0, %v68
    %v70 = vrot.slane %v65, %v69
    %vm72 = vcmask 261120
    %v74 = vsel %vm72, %v60, 0
    %76 = vmatprep.subr.mxu0 0.0
    %77 = vmatpush1.msra.mxu0 %v61
    %78 = vmatprep.subr.mxu0 0.0
    %79 = vmatpush1.msra.mxu0 %v62
    %80 = vmatprep.subr.mxu0 0.0
    %81 = vmatpush1.msra.mxu0 %v63
    %82 = vmatprep.subr.mxu0 0.0
    %83 = vmatpush1.msra.mxu0 %v64
    %84 = vmatprep.subr.mxu0 0.0
    %85 = vmatpush1.msra.mxu0 0.0
    %86 = vmatprep.subr.mxu0 0.0
    %87 = vmatpush1.msra.mxu0 0.0
    %88 = vmatprep.subr.mxu0 0.0
    %89 = vmatpush1.msra.mxu0 0.0
    %90 = vmatprep.subr.mxu0 0.0
    %91 = vmatpush1.msra.mxu0 0.0
    %92 = vmatprep.subr.mxu0 0.0
    %93 = vmatpush1.msra.mxu0 0.0
    %94 = vmatprep.subr.mxu0 0.0
    %95 = vmatpush1.msra.mxu0 0.0
    %96 = vmatprep.subr.mxu0 0.0
    %97 = vmatpush1.msra.mxu0 0.0
    %98 = vmatprep.subr.mxu0 0.0
    %99 = vmatpush1.msra.mxu0 0.0
    %100 = vmatprep.subr.mxu0 0.0
    %101 = vmatpush1.msra.mxu0 0.0
    %102 = vmatprep.subr.mxu0 0.0
    %103 = vmatpush1.msra.mxu0 0.0
    %104 = vmatprep.subr.mxu0 0.0
    %105 = vmatpush1.msra.mxu0 0.0
    %106 = vmatprep.subr.mxu0 0.0
    %107 = vmatpush1.msra.mxu0 0.0
    %108 = vmatprep.subr.mxu0 0.0
    %109 = vmatpush1.msra.mxu0 0.0
    %110 = vmatprep.subr.mxu0 0.0
    %111 = vmatpush1.msra.mxu0 0.0
    %112 = vmatprep.subr.mxu0 0.0
    %113 = vmatpush1.msra.mxu0 0.0
    %114 = vmatprep.subr.mxu0 0.0
    %115 = vmatpush1.msra.mxu0 0.0
    %116 = vmatprep.subr.mxu0 0.0
    %117 = vmatpush1.msra.mxu0 0.0
    %118 = vmatprep.subr.mxu0 0.0
    %119 = vmatpush1.msra.mxu0 0.0
    %120 = vmatprep.subr.mxu0 0.0
    %121 = vmatpush1.msra.mxu0 0.0
    %122 = vmatprep.subr.mxu0 0.0
    %123 = vmatpush1.msra.mxu0 0.0
    %124 = vmatprep.subr.mxu0 0.0
    %125 = vmatpush1.msra.mxu0 0.0
    %126 = vmatprep.subr.mxu0 0.0
    %127 = vmatpush1.msra.mxu0 0.0
    %128 = vmatprep.subr.mxu0 0.0
    %129 = vmatpush1.msra.mxu0 0.0
    %130 = vmatprep.subr.mxu0 0.0
    %131 = vmatpush1.msra.mxu0 0.0
    %132 = vmatprep.subr.mxu0 0.0
    %133 = vmatpush1.msra.mxu0 0.0
    %134 = vmatprep.subr.mxu0 0.0
    %135 = vmatpush1.msra.mxu0 0.0
    %136 = vmatprep.subr.mxu0 0.0
    %137 = vmatpush1.msra.mxu0 0.0
    %138 = vmatprep.subr.mxu0 0.0
    %139 = vmatpush1.msra.mxu0 0.0
    %140 = vmatprep.mubr.f32.mxu0 0.0
    %141 = vmatmul.mubr.f32.gmra.mrb[0].mxu0 %v74
    %v142 = vpop.f32.mrb[0].mxu0
    %v143 = vadd.f32 %v70, %v142
    %v144 = vpop.f32.mrb[0].mxu0
    %145 = vdwg.mxu0
    %v146 = vld [vmem:[#allocation7] sm:$0xff]
    %v147 = vld [vmem:[#allocation7 + $0x8] sm:$0xff]
    %v148 = vld [vmem:[#allocation7 + $0x10] sm:$0xff]
    %v149 = vld [vmem:[#allocation7 + $0x18] sm:$0xff]
    %v150 = vld [vmem:[#allocation7 + $0x20] sm:$0xff]
    %v151 = vld [vmem:[#allocation7 + $0x28] sm:$0xff]
    %v152 = vld [vmem:[#allocation7 + $0x30] sm:$0xff]
    %v153 = vld [vmem:[#allocation7 + $0x38] sm:$0xff]
    %v154 = vld [vmem:[#allocation7 + $0x40] sm:$0xff]
    %v155 = vld [vmem:[#allocation7 + $0x48] sm:$0xff]
    %v156 = vld [vmem:[#allocation7 + $0x50] sm:$0xff]
    %v157 = vld [vmem:[#allocation7 + $0x58] sm:$0xff]
    %v158 = vld [vmem:[#allocation7 + $0x60] sm:$0xff]
    %v159 = vld [vmem:[#allocation7 + $0x68] sm:$0xff]
    %v160 = vld [vmem:[#allocation7 + $0x70] sm:$0xff]
    %v161 = vld [vmem:[#allocation7 + $0x78] sm:$0xff]
    %v162 = vld [vmem:[%s4] sm:$0x1]
    %v164 = vlaneseq
    %v165 = vshrl.u32 %v164, 7
    %v166 = vsub.s32 0, %v165
    %v167 = vrot.slane %v162, %v166
    %169 = vmatprep.subr.mxu0 0.0
    %170 = vmatpush1.msra.mxu0 %v146
    %171 = vmatprep.subr.mxu0 0.0
    %172 = vmatpush1.msra.mxu0 %v147
    %173 = vmatprep.subr.mxu0 0.0
    %174 = vmatpush1.msra.mxu0 %v148
    %175 = vmatprep.subr.mxu0 0.0
    %176 = vmatpush1.msra.mxu0 %v149
    %177 = vmatprep.subr.mxu0 0.0
    %178 = vmatpush1.msra.mxu0 %v150
    %179 = vmatprep.subr.mxu0 0.0
    %180 = vmatpush1.msra.mxu0 %v151
    %181 = vmatprep.subr.mxu0 0.0
    %182 = vmatpush1.msra.mxu0 %v152
    %183 = vmatprep.subr.mxu0 0.0
    %184 = vmatpush1.msra.mxu0 %v153
    %185 = vmatprep.subr.mxu0 0.0
    %186 = vmatpush1.msra.mxu0 %v154
    %187 = vmatprep.subr.mxu0 0.0
    %188 = vmatpush1.msra.mxu0 %v155
    %189 = vmatprep.subr.mxu0 0.0
    %190 = vmatpush1.msra.mxu0 %v156
    %191 = vmatprep.subr.mxu0 0.0
    %192 = vmatpush1.msra.mxu0 %v157
    %193 = vmatprep.subr.mxu0 0.0
    %194 = vmatpush1.msra.mxu0 %v158
    %195 = vmatprep.subr.mxu0 0.0
    %196 = vmatpush1.msra.mxu0 %v159
    %197 = vmatprep.subr.mxu0 0.0
    %198 = vmatpush1.msra.mxu0 %v160
    %199 = vmatprep.subr.mxu0 0.0
    %200 = vmatpush1.msra.mxu0 %v161
    %201 = vmatprep.subr.mxu0 0.0
    %202 = vmatpush1.msra.mxu0 0.0
    %203 = vmatprep.subr.mxu0 0.0
    %204 = vmatpush1.msra.mxu0 0.0
    %205 = vmatprep.subr.mxu0 0.0
    %206 = vmatpush1.msra.mxu0 0.0
    %207 = vmatprep.subr.mxu0 0.0
    %208 = vmatpush1.msra.mxu0 0.0
    %209 = vmatprep.subr.mxu0 0.0
    %210 = vmatpush1.msra.mxu0 0.0
    %211 = vmatprep.subr.mxu0 0.0
    %212 = vmatpush1.msra.mxu0 0.0
    %213 = vmatprep.subr.mxu0 0.0
    %214 = vmatpush1.msra.mxu0 0.0
    %215 = vmatprep.subr.mxu0 0.0
    %216 = vmatpush1.msra.mxu0 0.0
    %217 = vmatprep.subr.mxu0 0.0
    %218 = vmatpush1.msra.mxu0 0.0
    %219 = vmatprep.subr.mxu0 0.0
    %220 = vmatpush1.msra.mxu0 0.0
    %221 = vmatprep.subr.mxu0 0.0
    %222 = vmatpush1.msra.mxu0 0.0
    %223 = vmatprep.subr.mxu0 0.0
    %224 = vmatpush1.msra.mxu0 0.0
    %225 = vmatprep.subr.mxu0 0.0
    %226 = vmatpush1.msra.mxu0 0.0
    %227 = vmatprep.subr.mxu0 0.0
    %228 = vmatpush1.msra.mxu0 0.0
    %229 = vmatprep.subr.mxu0 0.0
    %230 = vmatpush1.msra.mxu0 0.0
    %231 = vmatprep.subr.mxu0 0.0
    %232 = vmatpush1.msra.mxu0 0.0
    %233 = vmatprep.mubr.f32.mxu0 0.0
    %234 = vmatmul.mubr.f32.gmra.mrb[0].mxu0 %v143
    %v235 = vpop.f32.mrb[0].mxu0
    %v236 = vadd.f32 %v167, %v235
    %v237 = vpop.f32.mrb[0].mxu0
    %238 = vdwg.mxu0
    %239 = vmax.xlane.f32.xlu0 %v236
    %v240 = vpop.xlane.xlu0 %239
    %v241 = vsub.f32 %v236, %v240
    %v242 = vmul.f32 %v241, 1.442695
    %v243 = vpow.pop %v242
    %244 = vadd.xlane.f32.xlu0 %v243
    %v245 = vpop.xlane.xlu0 %244
    %v246 = vrcp.pop %v245
    %v247 = vmul.f32 1.0, %v246
    %v248 = vmul.f32 %v243, %v247
    %249 = vst [vmem:[#allocation8] sm:$0xff] %v248
    // Predicated region
    $region34: #{tpu_custom_call.1} parent=1 // pred_check
      _
    $region35: #{tpu_custom_call.1} parent=1 // pred_check_branch
      %251 = sbr.rel (0) target = $region37
    $region36: #{tpu_custom_call.1} parent=1 // pred_region
      %s253 = ssub.s32 128, 128
      %254 = vsyncadd [#allocation4], %s253
      %s256 = sshll.u32 [#allocation8], 4
      %s257 = int_to_ptr.vmem [resolvable:$true] %s256
      %259 = dma.vmem_to_hbm [thread:$0]  %s257, 128, %s5, [#allocation4]
    $region37: #{tpu_custom_call.1} parent=1 // pred_fallthru
      _
    // Predicated region
    $region38: #{tpu_custom_call.1} parent=1 // pred_check
      _
    $region39: #{tpu_custom_call.1} parent=1 // pred_check_branch
      %261 = sbr.rel (0) target = $region41
    $region40: #{tpu_custom_call.1} parent=1 // pred_region
      %262 = dma.done [#allocation4], 128
    $region41: #{tpu_custom_call.1} parent=1 // pred_fallthru
      _
    %263 = vsyncpa [#allocation3], 1
    %264 = vsyncpa [#allocation6], 1
    %265 = vsyncpa [#allocation4], 1

</llo_original>
